<compile_context>
chip_gen: v5e
topology: v5e:2x2
jax: 0.10.0
libtpu: 0.0.40
codegen_flags: <defaults>
</compile_context>

<pallas_src>
import numpy as np
import jax
import jax.numpy as jnp
from jax.experimental import pallas as pl
from jax.experimental.pallas import tpu as pltpu

# --- constants matching the PyTorch module ----------------------------------
SAMPLE_RATE = 16000
N_FFT = 1024
WIN_LENGTH = 1024
HOP_LENGTH = 160
N_MELS = 128
F_MIN = 0.0
F_MAX = SAMPLE_RATE / 2.0
N_FREQS = N_FFT // 2 + 1        # 513 onesided bins
N_FREQS_USED = 512              # drop Nyquist bin: its slaney mel weights are exactly 0
MAX_ROW_TILE = 256              # fills MXU M on v6e/v7x; >= M on v5e (4x128 MXU)


# --- mel filterbank (slaney scale + slaney norm), matches torchaudio ---------
def _hz_to_mel_slaney(freq):
    f_sp = 200.0 / 3.0
    min_log_hz = 1000.0
    min_log_mel = min_log_hz / f_sp
    logstep = np.log(6.4) / 27.0
    freq = np.asarray(freq, dtype=np.float64)
    mels = freq / f_sp
    return np.where(freq >= min_log_hz,
                    min_log_mel + np.log(np.maximum(freq, 1e-10) / min_log_hz) / logstep,
                    mels)


def _mel_to_hz_slaney(mels):
    f_sp = 200.0 / 3.0
    min_log_hz = 1000.0
    min_log_mel = min_log_hz / f_sp
    logstep = np.log(6.4) / 27.0
    mels = np.asarray(mels, dtype=np.float64)
    freqs = f_sp * mels
    return np.where(mels >= min_log_mel,
                    min_log_hz * np.exp(logstep * (mels - min_log_mel)),
                    freqs)


def make_mel_fbanks():
    all_freqs = np.linspace(0.0, SAMPLE_RATE // 2, N_FREQS)
    m_min = _hz_to_mel_slaney(F_MIN)
    m_max = _hz_to_mel_slaney(F_MAX)
    m_pts = np.linspace(m_min, m_max, N_MELS + 2)
    f_pts = _mel_to_hz_slaney(m_pts)
    f_diff = f_pts[1:] - f_pts[:-1]                       # (n_mels+1,)
    slopes = f_pts[None, :] - all_freqs[:, None]          # (n_freqs, n_mels+2)
    down_slopes = -slopes[:, :-2] / f_diff[:-1]
    up_slopes = slopes[:, 2:] / f_diff[1:]
    fb = np.maximum(0.0, np.minimum(down_slopes, up_slopes))   # (513, 128)
    enorm = 2.0 / (f_pts[2:N_MELS + 2] - f_pts[:N_MELS])        # slaney norm
    fb = fb * enorm[None, :]
    return fb.astype(np.float32)


def build_params():
    """Fused bf16 [cos | sin] DFT basis with the Hann window folded in, plus f32 mel fb."""
    n = np.arange(N_FFT)[:, None].astype(np.float64)
    k = np.arange(N_FREQS_USED)[None, :].astype(np.float64)     # Nyquist bin dropped
    ang = 2.0 * np.pi * n * k / N_FFT
    # periodic Hann window (torch.hann_window default), folded into the basis
    window = (0.5 - 0.5 * np.cos(2.0 * np.pi * np.arange(N_FFT) / N_FFT))[:, None]
    basis = np.concatenate([np.cos(ang) * window, np.sin(ang) * window],
                           axis=1).astype(np.float32)            # (1024, 1024)
    mel_fb = make_mel_fbanks()[:N_FREQS_USED, :]                 # (512, 128); dropped row is all-zero
    return (jnp.asarray(basis, dtype=jnp.bfloat16),
            jnp.asarray(mel_fb, dtype=jnp.float32))


# --- Pallas kernel ------------------------------------------------------------
def logmel_kernel(frames_ref, basis_ref, mel_ref, out_ref):
    f = frames_ref[...]                                          # (tile, 1024) bf16
    # single fused MXU matmul against windowed [cos | sin] basis, f32 accumulation
    ri = jnp.dot(f, basis_ref[...], preferred_element_type=jnp.float32)   # (tile, 1024)
    re = ri[:, :N_FREQS_USED]
    im = ri[:, N_FREQS_USED:]
    mag = jnp.sqrt(re * re + im * im)                            # power=1.0 magnitude, f32
    mel = jnp.dot(mag, mel_ref[...], preferred_element_type=jnp.float32)  # (tile, 128)
    out_ref[...] = jnp.log(jnp.maximum(mel, 1e-5))               # log(clamp(., min=1e-5))


# --- wrapper ------------------------------------------------------------------
@jax.jit
def log_mel_spectrogram(wav, basis, mel_fb):
    """wav: (B, T) float32 -> (B, N_MELS, num_frames) float32 log-mel."""
    B, T = wav.shape
    padding = (N_FFT - HOP_LENGTH) // 2                          # 432, as in the PyTorch module
    wav_p = jnp.pad(wav, ((0, 0), (padding, padding)), mode="reflect")
    L = T + 2 * padding
    num_frames = 1 + (L - N_FFT) // HOP_LENGTH                   # center=False framing

    # Frame extraction without a gather:
    #   frame[r, q*HOP + s] = chunk[r + q, s]   (N_FFT = 6*HOP + 64  ->  7 shifted slices)
    # where `chunks` is the non-overlapping HOP-sized reshape of the padded audio.
    n_sub = -(-N_FFT // HOP_LENGTH)                              # 7
    n_chunks = num_frames + n_sub - 1
    L_c = n_chunks * HOP_LENGTH
    wav_c = wav_p
    if L_c > L:
        wav_c = jnp.pad(wav_c, ((0, 0), (0, L_c - L)))
    wav_c = wav_c[:, :L_c].astype(jnp.bfloat16)                  # bf16 frames; f32 accumulate in-kernel
    chunks = wav_c.reshape(B, n_chunks, HOP_LENGTH)
    frames = jnp.concatenate(
        [chunks[:, q:q + num_frames, :] for q in range(n_sub)], axis=2)[:, :, :N_FFT]
    frames = frames.reshape(B * num_frames, N_FFT)               # (rows, 1024) bf16
    # TODO(synk): the remaining ~6.4x frame expansion in HBM could be removed by passing raw
    # audio with memory_space=pl.ANY and doing overlapping-window DMA + framing in-kernel.

    rows = B * num_frames
    # large row tile (up to 256); multiple of 16 so the bf16 sublane packing is native.
    row_tile = min(MAX_ROW_TILE, ((rows + 15) // 16) * 16)
    rows_pad = pl.cdiv(rows, row_tile) * row_tile
    frames = jnp.pad(frames, ((0, rows_pad - rows), (0, 0)))

    out = pl.pallas_call(
        logmel_kernel,
        out_shape=jax.ShapeDtypeStruct((rows_pad, N_MELS), jnp.float32),
        grid_spec=pltpu.PrefetchScalarGridSpec(
            num_scalar_prefetch=0,
            grid=(rows_pad // row_tile,),
            in_specs=[
                pl.BlockSpec((row_tile, N_FFT), lambda i: (i, 0)),            # frames (bf16)
                pl.BlockSpec((N_FFT, 2 * N_FREQS_USED), lambda i: (0, 0)),    # fused cos|sin basis (bf16)
                pl.BlockSpec((N_FREQS_USED, N_MELS), lambda i: (0, 0)),       # mel filterbank (f32)
            ],
            out_specs=pl.BlockSpec((row_tile, N_MELS), lambda i: (i, 0)),     # lane-dense (128) output
        ),
        compiler_params=pltpu.CompilerParams(
            dimension_semantics=("parallel",)),
    )(frames, basis, mel_fb)

    out = out[:rows].reshape(B, num_frames, N_MELS)
    return jnp.transpose(out, (0, 2, 1))                         # (B, n_mels, num_frames)


if __name__ == "__main__":
    key = jax.random.PRNGKey(0)
    B, T = 2, 960                                                # T > reflect padding (432)
    wav = jax.random.normal(key, (B, T), dtype=jnp.float32)

    basis, mel_fb = build_params()
    out = jax.block_until_ready(log_mel_spectrogram(wav, basis, mel_fb))

    padding = (N_FFT - HOP_LENGTH) // 2
    expected_frames = 1 + (T + 2 * padding - N_FFT) // HOP_LENGTH
    assert out.shape == (B, N_MELS, expected_frames), out.shape
    assert out.dtype == jnp.float32
    assert bool(jnp.all(jnp.isfinite(out)))
    print("KERNEL_OK")
</pallas_src>

<mosaic_0001>
module attributes {stable_mosaic.version = 11 : i64} {
  func.func @logmel_kernel(%arg0: i32, %arg1: memref<16x1024xbf16, #tpu.memory_space<vmem>>, %arg2: memref<1024x1024xbf16, #tpu.memory_space<vmem>>, %arg3: memref<512x128xf32, #tpu.memory_space<vmem>>, %arg4: memref<16x128xf32, #tpu.memory_space<vmem>>) attributes {dimension_semantics = [#tpu.dimension_semantics<parallel>], iteration_bounds = array<i64: 1>, scalar_prefetch = 0 : i64, scratch_operands = 0 : i64, tpu.core_type = #tpu.core_type<tc>, window_params = [{transform_indices = @transform_0, window_bounds = array<i64: 16, 1024>}, {pipeline_mode = #tpu.pipeline_mode<synchronous>, transform_indices = @transform_1, window_bounds = array<i64: 1024, 1024>}, {pipeline_mode = #tpu.pipeline_mode<synchronous>, transform_indices = @transform_2, window_bounds = array<i64: 512, 128>}, {transform_indices = @transform_3, window_bounds = array<i64: 16, 128>}]} {
    %c0 = arith.constant 0 : index
    %c0_0 = arith.constant 0 : index
    %0 = vector.load %arg1[%c0, %c0_0] : memref<16x1024xbf16, #tpu.memory_space<vmem>>, vector<16x1024xbf16>
    %c0_1 = arith.constant 0 : index
    %c0_2 = arith.constant 0 : index
    %1 = vector.load %arg2[%c0_1, %c0_2] : memref<1024x1024xbf16, #tpu.memory_space<vmem>>, vector<1024x1024xbf16>
    %cst = arith.constant dense<0.000000e+00> : vector<16x1024xf32>
    %2 = tpu.matmul %0, %1, %cst {dimension_numbers = #tpu.dot_dimension_numbers<[1], [0], [0], [1], [0, 0, 1, 1], [], []>} : vector<16x1024xbf16>, vector<1024x1024xbf16>, vector<16x1024xf32> -> vector<16x1024xf32>
    %3 = vector.extract_strided_slice %2 {offsets = [0, 0], sizes = [16, 512], strides = [1, 1]} : vector<16x1024xf32> to vector<16x512xf32>
    %4 = vector.extract_strided_slice %2 {offsets = [0, 512], sizes = [16, 512], strides = [1, 1]} : vector<16x1024xf32> to vector<16x512xf32>
    %5 = arith.mulf %3, %3 : vector<16x512xf32>
    %6 = arith.mulf %4, %4 : vector<16x512xf32>
    %7 = arith.addf %5, %6 : vector<16x512xf32>
    %8 = math.sqrt %7 : vector<16x512xf32>
    %c0_3 = arith.constant 0 : index
    %c0_4 = arith.constant 0 : index
    %9 = vector.load %arg3[%c0_3, %c0_4] : memref<512x128xf32, #tpu.memory_space<vmem>>, vector<512x128xf32>
    %cst_5 = arith.constant dense<0.000000e+00> : vector<16x128xf32>
    %10 = tpu.matmul %8, %9, %cst_5 {dimension_numbers = #tpu.dot_dimension_numbers<[1], [0], [0], [1], [0, 0, 1, 1], [], []>} : vector<16x512xf32>, vector<512x128xf32>, vector<16x128xf32> -> vector<16x128xf32>
    %cst_6 = arith.constant 9.99999974E-6 : f32
    %11 = vector.broadcast %cst_6 : f32 to vector<16x128xf32>
    %12 = arith.maximumf %10, %11 : vector<16x128xf32>
    %13 = math.log %12 : vector<16x128xf32>
    %c0_7 = arith.constant 0 : index
    %c0_8 = arith.constant 0 : index
    %14 = vector.load %arg4[%c0_7, %c0_8] : memref<16x128xf32, #tpu.memory_space<vmem>>, vector<16x128xf32>
    tpu.vector_store %arg4[%c0_7, %c0_8], %13 {strides = array<i32>} : memref<16x128xf32, #tpu.memory_space<vmem>>, vector<16x128xf32>,
    return
  }
  func.func @transform_0(%arg0: i32) -> (i32, i32) {
    %c0_i32 = arith.constant 0 : i32
    %c0_i32_0 = arith.constant 0 : i32
    return %arg0, %c0_i32 : i32, i32
  }
  func.func @transform_1(%arg0: i32) -> (i32, i32) {
    %c0_i32 = arith.constant 0 : i32
    %c0_i32_0 = arith.constant 0 : i32
    %c0_i32_1 = arith.constant 0 : i32
    return %c0_i32, %c0_i32_0 : i32, i32
  }
  func.func @transform_2(%arg0: i32) -> (i32, i32) {
    %c0_i32 = arith.constant 0 : i32
    %c0_i32_0 = arith.constant 0 : i32
    %c0_i32_1 = arith.constant 0 : i32
    return %c0_i32, %c0_i32_0 : i32, i32
  }
  func.func @transform_3(%arg0: i32) -> (i32, i32) {
    %c0_i32 = arith.constant 0 : i32
    %c0_i32_0 = arith.constant 0 : i32
    return %arg0, %c0_i32 : i32, i32
  }
}

</mosaic_0001>

<llo_original>
// kernel: reverse.1
$region0: #{reverse.1}
  %s0 = inlined_call_operand.vmem [shape: bf16[2,512], index: 0, kind: input, shape index: {}]
  %s1 = inlined_call_operand.vmem [shape: bf16[2,512], index: 1, kind: output, shape index: {}]
  %v2 = vlaneseq
  %v3 = vsub.s32 127, %v2
  %4 = vset.pattern.permute.xlu0 %v3
  $region1: #{reverse.1} parent=0
    #allocation0 [shape = 'u8[4096]{0}', space=vmem, size = 0x1000, scoped, tag = 'operand span for operand 0']
    #allocation1 [shape = 'u8[1024]{0}', space=vmem, size = 0x400, scoped, tag = 'packed  for operand 0']
    #allocation2 [shape = 'u8[4096]{0}', space=vmem, size = 0x1000, scoped, tag = 'operand span for operand 1']
    #allocation3 [shape = 'u8[1024]{0}', space=vmem, size = 0x400, scoped, tag = 'packed  for operand 1']
    loop: start=0, step=1, limit=6
    $region2: #{reverse.1} parent=1 // loop_pre_header
      _
    $region3: #{reverse.1} parent=1 // loop_header
      %s6 = sphi 0, %s10
      %p7 = scmp.ge.s32.totalorder %s6, 6
      %s13 = sphi 0, %s25
      %s14 = sphi 0, %s21
      %s15 = sphi 0, %s13
      %s16 = sphi 0, %s14
      %s17 = sphi 0, %s15
      %s18 = sphi 0, %s16
    $region4: #{reverse.1} parent=1 // loop_header_branch
      %9 = sbr.rel (%p7) target = $region8
    $region5: #{reverse.1} parent=1 // loop_body
      %s11 = ssub.s32 %s6, 1
      %s12 = ssub.s32 %s6, 2
      %s19 = sadd.s32 1, %s14
      %p20 = scmp.ge.s32.totalorder %s19, 4
      %s21 = scalar_select %p20, 0, %s19
      %s22 = sadd.s32 1, %s13
      %s23 = scalar_select %p20, %s22, %s13
      %p24 = scmp.ge.s32.totalorder %s23, 1
      %s25 = scalar_select %p24, 0, %s23
      %p26 = scmp.le.s32.totalorder 1, %s6
      %p27 = scmp.lt.s32.totalorder %s6, 5
      %p28 = pnand %p26, %p27
      %p29 = pneg %p28
      // Predicated region
      $region9: #{reverse.1} parent=5 // pred_check
        _
      $region10: #{reverse.1} parent=5 // pred_check_branch
        %31 = sbr.rel (%p28) target = $region12
      $region11: #{reverse.1} parent=5 // pred_region
        %s32 = ssub.s32 %s6, 1
      $region12: #{reverse.1} parent=5 // pred_fallthru
        _
      %p33 = scmp.lt.s32.totalorder %s6, 4
      // Predicated region
      $region13: #{reverse.1} parent=5 // pred_check
        %p34 = pneg %p33
      $region14: #{reverse.1} parent=5 // pred_check_branch
        %36 = sbr.rel (%p34) target = $region16
      $region15: #{reverse.1} parent=5 // pred_region
        %s37 = sand.u32 %s6, 1
        %s38 = sand.u32 %s6, 1
        %s39 = scalar_lea.vmem [#allocation1], %s38
        %s40 = ssub.s32 3, %s14
        %s41 = smul.addr %s13, 4
        %s42 = sadd.s32 %s40, %s41
        %s43 = scalar_lea.vmem %s0, %s42
        // Predicated region
        $region17: #{reverse.1} parent=15 // pred_check
          _
        $region18: #{reverse.1} parent=15 // pred_check_branch
          %45 = sbr.rel (0) target = $region20
        $region19: #{reverse.1} parent=15 // pred_region
          // Predicated region
          $region21: #{reverse.1} parent=19 // pred_check
            _
          $region22: #{reverse.1} parent=19 // pred_check_branch
            %47 = sbr.rel target = $region24
          $region23: #{reverse.1} parent=19 // pred_region
            // Predicated region
            $region36: #{reverse.1} parent=23 // pred_check
              _
            $region37: #{reverse.1} parent=23 // pred_check_branch
              %63 = sbr.rel (0) target = $region39
            $region38: #{reverse.1} parent=23 // pred_region
              %s65 = ssub.s32 2, 1
              loop: start=0, step=1, limit=1
              $region40: #{reverse.1} parent=38 // loop_pre_header
                _
              $region41: #{reverse.1} parent=38 // loop_header
                %s67 = sphi 0, %s71
                %p68 = scmp.ge.s32.totalorder %s67, 1
                %s72 = sphi %s43, %s43
                %s73 = sphi %s39, %s39
              $region42: #{reverse.1} parent=38 // loop_header_branch
                %70 = sbr.rel (%p68) target = $region46
              $region43: #{reverse.1} parent=38 // loop_body
                %v74 = vld [vmem:[%s72] sm:%s65]
                %75 = vst [vmem:[%s73] sm:%s65] %v74
              $region44: #{reverse.1} parent=38 // loop_footer
                %s71 = sadd.s32 1, %s67
              $region45: #{reverse.1} parent=38 // loop_footer_branch
                %66 = sbr.rel target = $region41
              $region46: #{reverse.1} parent=38 // loop_exit
                _
            $region39: #{reverse.1} parent=23 // pred_fallthru
              _
          $region24: #{reverse.1} parent=19 // pred_fallthru
            _
          // Predicated region
          $region25: #{reverse.1} parent=19 // pred_check
            _
          $region26: #{reverse.1} parent=19 // pred_check_branch
            %49 = sbr.rel (0) target = $region28
          $region27: #{reverse.1} parent=19 // pred_region
            %s51 = ssub.s32 2, 1
            loop: start=0, step=1, limit=1
            $region29: #{reverse.1} parent=27 // loop_pre_header
              _
            $region30: #{reverse.1} parent=27 // loop_header
              %s53 = sphi 0, %s57
              %p54 = scmp.ge.s32.totalorder %s53, 1
              %s58 = sphi %s43, %s43
              %s59 = sphi %s39, %s39
            $region31: #{reverse.1} parent=27 // loop_header_branch
              %56 = sbr.rel (%p54) target = $region35
            $region32: #{reverse.1} parent=27 // loop_body
              %v60 = vld [vmem:[%s58] sm:%s51]
              %61 = vst [vmem:[%s59] sm:%s51] %v60
            $region33: #{reverse.1} parent=27 // loop_footer
              %s57 = sadd.s32 1, %s53
            $region34: #{reverse.1} parent=27 // loop_footer_branch
              %52 = sbr.rel target = $region30
            $region35: #{reverse.1} parent=27 // loop_exit
              _
          $region28: #{reverse.1} parent=19 // pred_fallthru
            _
        $region20: #{reverse.1} parent=15 // pred_fallthru
          _
        %76 = vnop
      $region16: #{reverse.1} parent=5 // pred_fallthru
        _
      %p77 = scmp.le.s32.totalorder 1, %s6
      %p78 = scmp.lt.s32.totalorder %s6, 5
      %p79 = pnand %p77, %p78
      %p80 = pneg %p79
      // Predicated region
      $region47: #{reverse.1} parent=5 // pred_check
        _
      $region48: #{reverse.1} parent=5 // pred_check_branch
        %82 = sbr.rel (%p79) target = $region50
      $region49: #{reverse.1} parent=5 // pred_region
        %s83 = ssub.s32 %s6, 1
        %s84 = sand.u32 %s11, 1
        %s85 = sand.u32 %s11, 1
        %s86 = scalar_lea.vmem [#allocation1], %s85
        %s87 = sand.u32 %s11, 1
        %s88 = sand.u32 %s11, 1
        %s89 = scalar_lea.vmem [#allocation1], %s88
        %s90 = sand.u32 %s11, 1
        %s91 = sand.u32 %s11, 1
        %s92 = scalar_lea.vmem [#allocation3], %s91
        %s94 = ssub.s32 4, 1
        %s95 = sshrl.u32 %s94, 1
        %s96 = sor.u32 %s94, %s95
        %s97 = sand.u32 %s96, 85
        %s98 = sshrl.u32 %s97, 1
        %s99 = sor.u32 %s97, %s98
        %s100 = sand.u32 51, %s99
        %s101 = sshrl.u32 %s100, 2
        %s102 = sor.u32 %s100, %s101
        %s103 = sand.u32 15, %s102
        %v104 = vld [vmem:[%s89] sm:%s103]
        %v105 = vunpack.c.l.bf16 %v104
        %v106 = vunpack.c.h.bf16 %v104
        %107 = vst [vmem:[#allocation0] sm:%s94] %v105
        %s108 = ssub.s32 3, %s16
        %v109 = vld [vmem:[#allocation0] sm:$0xff]
        %110 = vperm.xlu0 %4, %v109
        %v111 = vpop.permute.xlu0 %110
        %112 = vst [vmem:[#allocation2] sm:$0xff] %v111
        %s114 = ssub.s32 4, 1
        %v115 = vld [vmem:[#allocation2] sm:%s114]
        %v116 = vpack.c.bf16 0.0, %v115
        %s118 = ssub.s32 2, 1
        %119 = vst [vmem:[%s92] sm:%s118] %v116
        %s120 = sand.u32 %s11, 1
        %s121 = sand.u32 %s11, 1
        %s122 = scalar_lea.vmem [#allocation3], %s121
        %s123 = smul.addr %s15, 4
        %s124 = sadd.s32 %s16, %s123
        %s125 = scalar_lea.vmem %s1, %s124
        // Predicated region
        $region51: #{reverse.1} parent=49 // pred_check
          _
        $region52: #{reverse.1} parent=49 // pred_check_branch
          %127 = sbr.rel (0) target = $region54
        $region53: #{reverse.1} parent=49 // pred_region
          // Predicated region
          $region55: #{reverse.1} parent=53 // pred_check
            _
          $region56: #{reverse.1} parent=53 // pred_check_branch
            %129 = sbr.rel target = $region58
          $region57: #{reverse.1} parent=53 // pred_region
            // Predicated region
            $region70: #{reverse.1} parent=57 // pred_check
              _
            $region71: #{reverse.1} parent=57 // pred_check_branch
              %145 = sbr.rel (0) target = $region73
            $region72: #{reverse.1} parent=57 // pred_region
              %s147 = ssub.s32 2, 1
              loop: start=0, step=1, limit=1
              $region74: #{reverse.1} parent=72 // loop_pre_header
                _
              $region75: #{reverse.1} parent=72 // loop_header
                %s149 = sphi 0, %s153
                %p150 = scmp.ge.s32.totalorder %s149, 1
                %s154 = sphi %s122, %s122
                %s155 = sphi %s125, %s125
              $region76: #{reverse.1} parent=72 // loop_header_branch
                %152 = sbr.rel (%p150) target = $region80
              $region77: #{reverse.1} parent=72 // loop_body
                %v156 = vld [vmem:[%s154] sm:%s147]
                %157 = vst [vmem:[%s155] sm:%s147] %v156
              $region78: #{reverse.1} parent=72 // loop_footer
                %s153 = sadd.s32 1, %s149
              $region79: #{reverse.1} parent=72 // loop_footer_branch
                %148 = sbr.rel target = $region75
              $region80: #{reverse.1} parent=72 // loop_exit
                _
            $region73: #{reverse.1} parent=57 // pred_fallthru
              _
          $region58: #{reverse.1} parent=53 // pred_fallthru
            _
          // Predicated region
          $region59: #{reverse.1} parent=53 // pred_check
            _
          $region60: #{reverse.1} parent=53 // pred_check_branch
            %131 = sbr.rel (0) target = $region62
          $region61: #{reverse.1} parent=53 // pred_region
            %s133 = ssub.s32 2, 1
            loop: start=0, step=1, limit=1
            $region63: #{reverse.1} parent=61 // loop_pre_header
              _
            $region64: #{reverse.1} parent=61 // loop_header
              %s135 = sphi 0, %s139
              %p136 = scmp.ge.s32.totalorder %s135, 1
              %s140 = sphi %s122, %s122
              %s141 = sphi %s125, %s125
            $region65: #{reverse.1} parent=61 // loop_header_branch
              %138 = sbr.rel (%p136) target = $region69
            $region66: #{reverse.1} parent=61 // loop_body
              %v142 = vld [vmem:[%s140] sm:%s133]
              %143 = vst [vmem:[%s141] sm:%s133] %v142
            $region67: #{reverse.1} parent=61 // loop_footer
              %s139 = sadd.s32 1, %s135
            $region68: #{reverse.1} parent=61 // loop_footer_branch
              %134 = sbr.rel target = $region64
            $region69: #{reverse.1} parent=61 // loop_exit
              _
          $region62: #{reverse.1} parent=53 // pred_fallthru
            _
        $region54: #{reverse.1} parent=49 // pred_fallthru
          _
        %158 = vnop
      $region50: #{reverse.1} parent=5 // pred_fallthru
        _
      %p159 = scmp.le.s32.totalorder 2, %s6
      // Predicated region
      $region81: #{reverse.1} parent=5 // pred_check
        %p160 = pneg %p159
      $region82: #{reverse.1} parent=5 // pred_check_branch
        %162 = sbr.rel (%p160) target = $region84
      $region83: #{reverse.1} parent=5 // pred_region
        %s163 = ssub.s32 %s6, 2
        %s164 = sand.u32 %s12, 1
        %s165 = sand.u32 %s12, 1
        %s166 = scalar_lea.vmem [#allocation3], %s165
      $region84: #{reverse.1} parent=5 // pred_fallthru
        _
    $region6: #{reverse.1} parent=1 // loop_footer
      %s10 = sadd.s32 1, %s6
    $region7: #{reverse.1} parent=1 // loop_footer_branch
      %5 = sbr.rel target = $region3
    $region8: #{reverse.1} parent=1 // loop_exit
      _

</llo_original>
